<compile_context>
chip_gen: v6e
topology: v6e:2x2x1
jax: 0.10.0
libtpu: 0.0.40
codegen_flags: <defaults>
</compile_context>

<pallas_src>
import numpy as np
import jax
import jax.numpy as jnp
from jax.experimental import pallas as pl
from jax.experimental.pallas import tpu as pltpu

EPS = 0.003
H1 = 256   # fcs1 out
H2 = 128   # fcs2 / fca1 / fc2 out


def critic_kernel(state_ref, action_ref,
                  ws1_ref, bs1_ref,
                  ws2_ref, bs2_ref,
                  wa1_ref, ba1_ref,
                  w2_ref, b2_ref,
                  w3t_ref, b3_ref,
                  out_ref,
                  cat_scratch):
    s = state_ref[...]     # (TB, S) bf16
    a = action_ref[...]    # (TB, A) bf16

    # s1 = relu(state @ Ws1 + bs1)   (MXU in bf16, f32 accumulate, f32 elementwise)
    s1 = jnp.dot(s, ws1_ref[...], preferred_element_type=jnp.float32) + bs1_ref[...]
    s1 = jnp.maximum(s1, 0.0).astype(jnp.bfloat16)

    # s2 = relu(s1 @ Ws2 + bs2)
    s2 = jnp.dot(s1, ws2_ref[...], preferred_element_type=jnp.float32) + bs2_ref[...]
    s2 = jnp.maximum(s2, 0.0)

    # a1 = relu(action @ Wa1 + ba1)
    a1 = jnp.dot(a, wa1_ref[...], preferred_element_type=jnp.float32) + ba1_ref[...]
    a1 = jnp.maximum(a1, 0.0)

    # concat([s2, a1], axis=1) without an XLU concat: write the two halves into
    # a (TB, 256) VMEM scratch, then do a single K=256 contraction with fc2.
    cat_scratch[:, 0:H2] = s2.astype(jnp.bfloat16)
    cat_scratch[:, H2:2 * H2] = a1.astype(jnp.bfloat16)

    h = (jnp.dot(cat_scratch[...], w2_ref[...], preferred_element_type=jnp.float32)
         + b2_ref[...])
    h = jnp.maximum(h, 0.0)

    # q = h @ W3 + b3  -> N=1 matmul is wasteful on the MXU; do it on the
    # VPU (broadcast multiply) + XLU lane reduction instead.
    q = jnp.sum(h * w3t_ref[...], axis=-1, keepdims=True) + b3_ref[...]
    out_ref[...] = q.astype(out_ref.dtype)


def _round_up(x, m):
    return ((x + m - 1) // m) * m


def critic_forward(state, action, params, *, tb=None):
    (ws1, bs1, ws2, bs2, wa1, ba1, w2, b2, w3, b3) = params
    B, S = state.shape
    A = action.shape[1]

    # Batch tile: MXU-aligned 256 for large batches (v6e/v7x 2x256^2 MXU, also a
    # multiple of 128 for v5e); for tiny batches just pad up to a 16 multiple.
    if tb is None:
        tb = 256 if B >= 256 else max(16, _round_up(B, 16))
    b_pad = _round_up(B, tb)
    grid = (b_pad // tb,)

    def pad_b(x):
        return jnp.pad(x, ((0, b_pad - B), (0, 0))) if b_pad != B else x

    # Cast matmul operands to bf16 once in the wrapper (halves DMA + doubles MXU
    # rate); biases stay f32 and all elementwise math in-kernel is f32.
    state_bf = pad_b(state).astype(jnp.bfloat16)
    action_bf = pad_b(action).astype(jnp.bfloat16)
    ws1_bf = ws1.astype(jnp.bfloat16)
    ws2_bf = ws2.astype(jnp.bfloat16)
    wa1_bf = wa1.astype(jnp.bfloat16)
    w2_bf = w2.astype(jnp.bfloat16)
    w3t = w3.reshape(1, H2)           # final layer computed on VPU/XLU in f32

    def tile_spec(feat):
        return pl.BlockSpec((tb, feat), lambda i: (i, 0), memory_space=pltpu.VMEM)

    def resident_spec(shape):
        return pl.BlockSpec(shape, lambda i: (0,) * len(shape),
                            memory_space=pltpu.VMEM)

    args = (state_bf, action_bf,
            ws1_bf, bs1, ws2_bf, bs2, wa1_bf, ba1,
            w2_bf, b2, w3t, b3)
    in_specs = [tile_spec(S), tile_spec(A)] + [resident_spec(x.shape) for x in args[2:]]

    out = pl.pallas_call(
        critic_kernel,
        out_shape=jax.ShapeDtypeStruct((b_pad, 1), jnp.float32),
        grid=grid,
        in_specs=in_specs,
        out_specs=pl.BlockSpec((tb, 1), lambda i: (i, 0), memory_space=pltpu.VMEM),
        scratch_shapes=[pltpu.VMEM((tb, 2 * H2), jnp.bfloat16)],
        compiler_params=pltpu.CompilerParams(
            dimension_semantics=("parallel",),
            vmem_limit_bytes=32 * 1024 * 1024,
        ),
    )(*args)
    return out[:B]


def init_params(key, state_dim, action_dim):
    """Deterministic synthetic init mirroring the PyTorch module's shapes/ranges."""
    ks = jax.random.split(key, 10)
    v = 1.0 / np.sqrt(256.0)   # fanin_init range in the reference module

    def unif(k, shape, lim):
        return jax.random.uniform(k, shape, jnp.float32, minval=-lim, maxval=lim)

    # weights stored as (in, out); biases as (1, out) for TPU-friendly 2D layout
    ws1 = unif(ks[0], (state_dim, H1), v)
    bs1 = unif(ks[1], (1, H1), 1.0 / np.sqrt(state_dim))
    ws2 = unif(ks[2], (H1, H2), v)
    bs2 = unif(ks[3], (1, H2), 1.0 / np.sqrt(H1))
    wa1 = unif(ks[4], (action_dim, H2), v)
    ba1 = unif(ks[5], (1, H2), 1.0 / np.sqrt(action_dim))
    w2 = unif(ks[6], (H1, H2), v)          # fc2: in = 256 (concat of s2, a1)
    b2 = unif(ks[7], (1, H2), 1.0 / np.sqrt(H1))
    w3 = unif(ks[8], (H2, 1), EPS)
    b3 = unif(ks[9], (1, 1), 1.0 / np.sqrt(H2))   # PyTorch default bias init for fc3
    return (ws1, bs1, ws2, bs2, wa1, ba1, w2, b2, w3, b3)


def critic_reference(state, action, params):
    (ws1, bs1, ws2, bs2, wa1, ba1, w2, b2, w3, b3) = params
    s1 = jax.nn.relu(state @ ws1 + bs1)
    s2 = jax.nn.relu(s1 @ ws2 + bs2)
    a1 = jax.nn.relu(action @ wa1 + ba1)
    x = jnp.concatenate([s2, a1], axis=1)
    h = jax.nn.relu(x @ w2 + b2)
    return h @ w3 + b3


if __name__ == "__main__":
    B, STATE_DIM, ACTION_DIM = 2, 16, 8

    key = jax.random.PRNGKey(0)
    k_s, k_a, k_p = jax.random.split(key, 3)
    state = jax.random.normal(k_s, (B, STATE_DIM), jnp.float32)
    action = jax.random.normal(k_a, (B, ACTION_DIM), jnp.float32)
    params = init_params(k_p, STATE_DIM, ACTION_DIM)

    out = critic_forward(state, action, params)
    out = jax.block_until_ready(out)

    ref = critic_reference(state, action, params)
    # bf16 matmul operands (f32 accumulation) -> loosen tolerance vs. f32 reference
    np.testing.assert_allclose(np.asarray(out), np.asarray(ref), rtol=2e-2, atol=2e-2)

    print("KERNEL_OK")
</pallas_src>

<mosaic_0001>
module attributes {stable_mosaic.version = 11 : i64} {
  func.func @critic_kernel(%arg0: i32, %arg1: memref<16x16xbf16, #tpu.memory_space<vmem>>, %arg2: memref<16x8xbf16, #tpu.memory_space<vmem>>, %arg3: memref<16x256xbf16, #tpu.memory_space<vmem>>, %arg4: memref<1x256xf32, #tpu.memory_space<vmem>>, %arg5: memref<256x128xbf16, #tpu.memory_space<vmem>>, %arg6: memref<1x128xf32, #tpu.memory_space<vmem>>, %arg7: memref<8x128xbf16, #tpu.memory_space<vmem>>, %arg8: memref<1x128xf32, #tpu.memory_space<vmem>>, %arg9: memref<256x128xbf16, #tpu.memory_space<vmem>>, %arg10: memref<1x128xf32, #tpu.memory_space<vmem>>, %arg11: memref<1x128xf32, #tpu.memory_space<vmem>>, %arg12: memref<1x1xf32, #tpu.memory_space<vmem>>, %arg13: memref<16x1xf32, #tpu.memory_space<vmem>>, %arg14: memref<16x256xbf16, #tpu.memory_space<vmem>>) attributes {dimension_semantics = [#tpu.dimension_semantics<parallel>], iteration_bounds = array<i64: 1>, scalar_prefetch = 0 : i64, scratch_operands = 1 : i64, tpu.core_type = #tpu.core_type<tc>, window_params = [{transform_indices = @transform_0, window_bounds = array<i64: 16, 16>}, {transform_indices = @transform_1, window_bounds = array<i64: 16, 8>}, {pipeline_mode = #tpu.pipeline_mode<synchronous>, transform_indices = @transform_2, window_bounds = array<i64: 16, 256>}, {pipeline_mode = #tpu.pipeline_mode<synchronous>, transform_indices = @transform_3, window_bounds = array<i64: 1, 256>}, {pipeline_mode = #tpu.pipeline_mode<synchronous>, transform_indices = @transform_4, window_bounds = array<i64: 256, 128>}, {pipeline_mode = #tpu.pipeline_mode<synchronous>, transform_indices = @transform_5, window_bounds = array<i64: 1, 128>}, {pipeline_mode = #tpu.pipeline_mode<synchronous>, transform_indices = @transform_6, window_bounds = array<i64: 8, 128>}, {pipeline_mode = #tpu.pipeline_mode<synchronous>, transform_indices = @transform_7, window_bounds = array<i64: 1, 128>}, {pipeline_mode = #tpu.pipeline_mode<synchronous>, transform_indices = @transform_8, window_bounds = array<i64: 256, 128>}, {pipeline_mode = #tpu.pipeline_mode<synchronous>, transform_indices = @transform_9, window_bounds = array<i64: 1, 128>}, {pipeline_mode = #tpu.pipeline_mode<synchronous>, transform_indices = @transform_10, window_bounds = array<i64: 1, 128>}, {pipeline_mode = #tpu.pipeline_mode<synchronous>, transform_indices = @transform_11, window_bounds = array<i64: 1, 1>}, {transform_indices = @transform_12, window_bounds = array<i64: 16, 1>}]} {
    %c0 = arith.constant 0 : index
    %c0_0 = arith.constant 0 : index
    %0 = vector.load %arg1[%c0, %c0_0] : memref<16x16xbf16, #tpu.memory_space<vmem>>, vector<16x16xbf16>
    %c0_1 = arith.constant 0 : index
    %c0_2 = arith.constant 0 : index
    %1 = vector.load %arg2[%c0_1, %c0_2] : memref<16x8xbf16, #tpu.memory_space<vmem>>, vector<16x8xbf16>
    %c0_3 = arith.constant 0 : index
    %c0_4 = arith.constant 0 : index
    %2 = vector.load %arg3[%c0_3, %c0_4] : memref<16x256xbf16, #tpu.memory_space<vmem>>, vector<16x256xbf16>
    %cst = arith.constant dense<0.000000e+00> : vector<16x256xf32>
    %3 = tpu.matmul %0, %2, %cst {dimension_numbers = #tpu.dot_dimension_numbers<[1], [0], [0], [1], [0, 0, 1, 1], [], []>} : vector<16x16xbf16>, vector<16x256xbf16>, vector<16x256xf32> -> vector<16x256xf32>
    %c0_5 = arith.constant 0 : index
    %c0_6 = arith.constant 0 : index
    %4 = vector.load %arg4[%c0_5, %c0_6] : memref<1x256xf32, #tpu.memory_space<vmem>>, vector<1x256xf32>
    %5 = vector.broadcast %4 : vector<1x256xf32> to vector<16x256xf32>
    %6 = arith.addf %3, %5 : vector<16x256xf32>
    %cst_7 = arith.constant 0.000000e+00 : f32
    %7 = vector.broadcast %cst_7 : f32 to vector<16x256xf32>
    %8 = arith.maximumf %6, %7 : vector<16x256xf32>
    %9 = arith.truncf %8 : vector<16x256xf32> to vector<16x256xbf16>
    %c0_8 = arith.constant 0 : index
    %c0_9 = arith.constant 0 : index
    %10 = vector.load %arg5[%c0_8, %c0_9] : memref<256x128xbf16, #tpu.memory_space<vmem>>, vector<256x128xbf16>
    %cst_10 = arith.constant dense<0.000000e+00> : vector<16x128xf32>
    %11 = tpu.matmul %9, %10, %cst_10 {dimension_numbers = #tpu.dot_dimension_numbers<[1], [0], [0], [1], [0, 0, 1, 1], [], []>} : vector<16x256xbf16>, vector<256x128xbf16>, vector<16x128xf32> -> vector<16x128xf32>
    %c0_11 = arith.constant 0 : index
    %c0_12 = arith.constant 0 : index
    %12 = vector.load %arg6[%c0_11, %c0_12] : memref<1x128xf32, #tpu.memory_space<vmem>>, vector<1x128xf32>
    %13 = vector.broadcast %12 : vector<1x128xf32> to vector<16x128xf32>
    %14 = arith.addf %11, %13 : vector<16x128xf32>
    %cst_13 = arith.constant 0.000000e+00 : f32
    %15 = vector.broadcast %cst_13 : f32 to vector<16x128xf32>
    %16 = arith.maximumf %14, %15 : vector<16x128xf32>
    %c0_14 = arith.constant 0 : index
    %c0_15 = arith.constant 0 : index
    %17 = vector.load %arg7[%c0_14, %c0_15] : memref<8x128xbf16, #tpu.memory_space<vmem>>, vector<8x128xbf16>
    %cst_16 = arith.constant dense<0.000000e+00> : vector<16x128xf32>
    %18 = tpu.matmul %1, %17, %cst_16 {dimension_numbers = #tpu.dot_dimension_numbers<[1], [0], [0], [1], [0, 0, 1, 1], [], []>} : vector<16x8xbf16>, vector<8x128xbf16>, vector<16x128xf32> -> vector<16x128xf32>
    %c0_17 = arith.constant 0 : index
    %c0_18 = arith.constant 0 : index
    %19 = vector.load %arg8[%c0_17, %c0_18] : memref<1x128xf32, #tpu.memory_space<vmem>>, vector<1x128xf32>
    %20 = vector.broadcast %19 : vector<1x128xf32> to vector<16x128xf32>
    %21 = arith.addf %18, %20 : vector<16x128xf32>
    %cst_19 = arith.constant 0.000000e+00 : f32
    %22 = vector.broadcast %cst_19 : f32 to vector<16x128xf32>
    %23 = arith.maximumf %21, %22 : vector<16x128xf32>
    %24 = arith.truncf %16 : vector<16x128xf32> to vector<16x128xbf16>
    %c0_20 = arith.constant 0 : index
    %c0_21 = arith.constant 0 : index
    %25 = vector.load %arg14[%c0_20, %c0_21] : memref<16x256xbf16, #tpu.memory_space<vmem>>, vector<16x128xbf16>
    tpu.vector_store %arg14[%c0_20, %c0_21], %24 {strides = array<i32>} : memref<16x256xbf16, #tpu.memory_space<vmem>>, vector<16x128xbf16>,
    %26 = arith.truncf %23 : vector<16x128xf32> to vector<16x128xbf16>
    %c0_22 = arith.constant 0 : index
    %c128 = arith.constant 128 : index
    %27 = vector.load %arg14[%c0_22, %c128] : memref<16x256xbf16, #tpu.memory_space<vmem>>, vector<16x128xbf16>
    tpu.vector_store %arg14[%c0_22, %c128], %26 {strides = array<i32>} : memref<16x256xbf16, #tpu.memory_space<vmem>>, vector<16x128xbf16>,
    %c0_23 = arith.constant 0 : index
    %c0_24 = arith.constant 0 : index
    %28 = vector.load %arg14[%c0_23, %c0_24] : memref<16x256xbf16, #tpu.memory_space<vmem>>, vector<16x256xbf16>
    %c0_25 = arith.constant 0 : index
    %c0_26 = arith.constant 0 : index
    %29 = vector.load %arg9[%c0_25, %c0_26] : memref<256x128xbf16, #tpu.memory_space<vmem>>, vector<256x128xbf16>
    %cst_27 = arith.constant dense<0.000000e+00> : vector<16x128xf32>
    %30 = tpu.matmul %28, %29, %cst_27 {dimension_numbers = #tpu.dot_dimension_numbers<[1], [0], [0], [1], [0, 0, 1, 1], [], []>} : vector<16x256xbf16>, vector<256x128xbf16>, vector<16x128xf32> -> vector<16x128xf32>
    %c0_28 = arith.constant 0 : index
    %c0_29 = arith.constant 0 : index
    %31 = vector.load %arg10[%c0_28, %c0_29] : memref<1x128xf32, #tpu.memory_space<vmem>>, vector<1x128xf32>
    %32 = vector.broadcast %31 : vector<1x128xf32> to vector<16x128xf32>
    %33 = arith.addf %30, %32 : vector<16x128xf32>
    %cst_30 = arith.constant 0.000000e+00 : f32
    %34 = vector.broadcast %cst_30 : f32 to vector<16x128xf32>
    %35 = arith.maximumf %33, %34 : vector<16x128xf32>
    %c0_31 = arith.constant 0 : index
    %c0_32 = arith.constant 0 : index
    %36 = vector.load %arg11[%c0_31, %c0_32] : memref<1x128xf32, #tpu.memory_space<vmem>>, vector<1x128xf32>
    %37 = vector.broadcast %36 : vector<1x128xf32> to vector<16x128xf32>
    %38 = arith.mulf %35, %37 : vector<16x128xf32>
    %cst_33 = arith.constant dense<0.000000e+00> : vector<16xf32>
    %39 = vector.multi_reduction <add>, %38, %cst_33 [1] : vector<16x128xf32> to vector<16xf32>
    %40 = vector.shape_cast %39 : vector<16xf32> to vector<16x1xf32>
    %c0_34 = arith.constant 0 : index
    %c0_35 = arith.constant 0 : index
    %41 = vector.load %arg12[%c0_34, %c0_35] : memref<1x1xf32, #tpu.memory_space<vmem>>, vector<1x1xf32>
    %42 = vector.broadcast %41 : vector<1x1xf32> to vector<16x1xf32>
    %43 = arith.addf %40, %42 : vector<16x1xf32>
    %c0_36 = arith.constant 0 : index
    %c0_37 = arith.constant 0 : index
    %44 = vector.load %arg13[%c0_36, %c0_37] : memref<16x1xf32, #tpu.memory_space<vmem>>, vector<16x1xf32>
    tpu.vector_store %arg13[%c0_36, %c0_37], %43 {strides = array<i32>} : memref<16x1xf32, #tpu.memory_space<vmem>>, vector<16x1xf32>,
    return
  }
  func.func @transform_0(%arg0: i32) -> (i32, i32) {
    %c0_i32 = arith.constant 0 : i32
    %c0_i32_0 = arith.constant 0 : i32
    return %arg0, %c0_i32 : i32, i32
  }
  func.func @transform_1(%arg0: i32) -> (i32, i32) {
    %c0_i32 = arith.constant 0 : i32
    %c0_i32_0 = arith.constant 0 : i32
    return %arg0, %c0_i32 : i32, i32
  }
  func.func @transform_2(%arg0: i32) -> (i32, i32) {
    %c0_i32 = arith.constant 0 : i32
    %c0_i32_0 = arith.constant 0 : i32
    %c0_i32_1 = arith.constant 0 : i32
    return %c0_i32, %c0_i32_0 : i32, i32
  }
  func.func @transform_3(%arg0: i32) -> (i32, i32) {
    %c0_i32 = arith.constant 0 : i32
    %c0_i32_0 = arith.constant 0 : i32
    %c0_i32_1 = arith.constant 0 : i32
    return %c0_i32, %c0_i32_0 : i32, i32
  }
  func.func @transform_4(%arg0: i32) -> (i32, i32) {
    %c0_i32 = arith.constant 0 : i32
    %c0_i32_0 = arith.constant 0 : i32
    %c0_i32_1 = arith.constant 0 : i32
    return %c0_i32, %c0_i32_0 : i32, i32
  }
  func.func @transform_5(%arg0: i32) -> (i32, i32) {
    %c0_i32 = arith.constant 0 : i32
    %c0_i32_0 = arith.constant 0 : i32
    %c0_i32_1 = arith.constant 0 : i32
    return %c0_i32, %c0_i32_0 : i32, i32
  }
  func.func @transform_6(%arg0: i32) -> (i32, i32) {
    %c0_i32 = arith.constant 0 : i32
    %c0_i32_0 = arith.constant 0 : i32
    %c0_i32_1 = arith.constant 0 : i32
    return %c0_i32, %c0_i32_0 : i32, i32
  }
  func.func @transform_7(%arg0: i32) -> (i32, i32) {
    %c0_i32 = arith.constant 0 : i32
    %c0_i32_0 = arith.constant 0 : i32
    %c0_i32_1 = arith.constant 0 : i32
    return %c0_i32, %c0_i32_0 : i32, i32
  }
  func.func @transform_8(%arg0: i32) -> (i32, i32) {
    %c0_i32 = arith.constant 0 : i32
    %c0_i32_0 = arith.constant 0 : i32
    %c0_i32_1 = arith.constant 0 : i32
    return %c0_i32, %c0_i32_0 : i32, i32
  }
  func.func @transform_9(%arg0: i32) -> (i32, i32) {
    %c0_i32 = arith.constant 0 : i32
    %c0_i32_0 = arith.constant 0 : i32
    %c0_i32_1 = arith.constant 0 : i32
    return %c0_i32, %c0_i32_0 : i32, i32
  }
  func.func @transform_10(%arg0: i32) -> (i32, i32) {
    %c0_i32 = arith.constant 0 : i32
    %c0_i32_0 = arith.constant 0 : i32
    %c0_i32_1 = arith.constant 0 : i32
    return %c0_i32, %c0_i32_0 : i32, i32
  }
  func.func @transform_11(%arg0: i32) -> (i32, i32) {
    %c0_i32 = arith.constant 0 : i32
    %c0_i32_0 = arith.constant 0 : i32
    %c0_i32_1 = arith.constant 0 : i32
    return %c0_i32, %c0_i32_0 : i32, i32
  }
  func.func @transform_12(%arg0: i32) -> (i32, i32) {
    %c0_i32 = arith.constant 0 : i32
    %c0_i32_0 = arith.constant 0 : i32
    return %arg0, %c0_i32 : i32, i32
  }
}

</mosaic_0001>

<llo_original>
// kernel: tpu_custom_call.1
$region0: #{tpu_custom_call.1}
  #allocation0 [shape = 'u32[]', space=smem, size = 0x4, offset = 0x4, fixed_abs, tag = 'smem constant byte address 0x4 - core index']
  #allocation1 [shape = 'u32[144,128]{1,0:T(1,128)}', space=vmem, size = 0x12000, scoped, tag = 'internal scratch']
  #allocation2 [shape = 'bf16[16,256]{1,0:T(8,128)(2,1)}', space=vmem, size = 0x2000, scoped, tag = 'scratch operand']
  #allocation3 [shape = 'f32[1,1]{1,0:T(1,128)S(1)}', space=vmem, size = 0x200, scoped, tag = 'scoped memory for tpu_custom_call.1']
  %s0 = inlined_call_operand.hbm [shape: bf16[16,16], index: 0, kind: input, shape index: {}]
  %s1 = inlined_call_operand.vmem [shape: bf16[16,8], index: 1, kind: input, shape index: {}]
  %s2 = inlined_call_operand.vmem [shape: bf16[16,256], index: 2, kind: input, shape index: {}]
  %s3 = inlined_call_operand.hbm [shape: f32[1,256], index: 3, kind: input, shape index: {}]
  %s4 = inlined_call_operand.hbm [shape: bf16[256,128], index: 4, kind: input, shape index: {}]
  %s5 = inlined_call_operand.vmem [shape: f32[1,128], index: 5, kind: input, shape index: {}]
  %s6 = inlined_call_operand.vmem [shape: bf16[8,128], index: 6, kind: input, shape index: {}]
  %s7 = inlined_call_operand.vmem [shape: f32[1,128], index: 7, kind: input, shape index: {}]
  %s8 = inlined_call_operand.hbm [shape: bf16[256,128], index: 8, kind: input, shape index: {}]
  %s9 = inlined_call_operand.vmem [shape: f32[1,128], index: 9, kind: input, shape index: {}]
  %s10 = inlined_call_operand.vmem [shape: f32[1,128], index: 10, kind: input, shape index: {}]
  %s11 = inlined_call_operand.<no memory space> [shape: f32[1,1], index: 11, kind: input, shape index: {}]
  %s12 = inlined_call_operand.vmem [shape: f32[16,1], index: 12, kind: output, shape index: {}]
  %s13 = sld [smem:[#allocation0]]
  $region74: #{tpu_custom_call.1} parent=0
    _
  %s15 = ssub.s32 1, %s13
  %s16 = scalar_select 0, %s15, %s13
  %v17 = vstv %s11
  %18 = vst [vmem:[#allocation3] sm:$0x1] %v17
  $region1: #{tpu_custom_call.1} parent=0
    #allocation4 [shape = 'u8[4096]{0}', space=vmem, size = 0x1000, scoped, tag = 'input window, operand 0, single buffered']
    #allocation5 [shape = 's32[1]{0}', space=sflag, size = 0x4, scoped, tag = 'scoped memory for tpu_custom_call.1']
    #allocation6 [shape = 'u8[1024]{0}', space=vmem, size = 0x400, scoped, tag = 'input window, operand 3, single buffered']
    #allocation7 [shape = 's32[1]{0}', space=sflag, size = 0x4, scoped, tag = 'scoped memory for tpu_custom_call.1']
    #allocation8 [shape = 'u8[65536]{0}', space=vmem, size = 0x10000, scoped, tag = 'input window, operand 4, single buffered']
    #allocation9 [shape = 'u8[65536]{0}', space=vmem, size = 0x10000, scoped, tag = 'input window, operand 8, single buffered']
    #allocation10 [shape = 's32[1]{0}', space=sflag, size = 0x4, scoped, tag = 'scoped memory for tpu_custom_call.1']
    %19 = vsyncpa [#allocation5], 0
    %20 = vsyncpa [#allocation7], 0
    %21 = vsyncpa [#allocation10], 0
    // Predicated region
    $region2: #{tpu_custom_call.1} parent=1 // pred_check
      _
    $region3: #{tpu_custom_call.1} parent=1 // pred_check_branch
      %23 = sbr.rel (0) target = $region5
    $region4: #{tpu_custom_call.1} parent=1 // pred_region
      %s25 = ssub.s32 128, 128
      %26 = vsyncadd [#allocation5], %s25
      %s27 = sshll.u32 [#allocation4], 4
      %s28 = int_to_ptr.vmem [resolvable:$true] %s27
      %33 = dma.hbm_to_vmem [thread:$0]  %s0, 128, %s28, [#allocation5], 64, 64, 4
    $region5: #{tpu_custom_call.1} parent=1 // pred_fallthru
      _
    // Predicated region
    $region6: #{tpu_custom_call.1} parent=1 // pred_check
      _
    $region7: #{tpu_custom_call.1} parent=1 // pred_check_branch
      %35 = sbr.rel (0) target = $region9
    $region8: #{tpu_custom_call.1} parent=1 // pred_region
      _
    $region9: #{tpu_custom_call.1} parent=1 // pred_fallthru
      _
    // Predicated region
    $region10: #{tpu_custom_call.1} parent=1 // pred_check
      _
    $region11: #{tpu_custom_call.1} parent=1 // pred_check_branch
      %37 = sbr.rel (0) target = $region13
    $region12: #{tpu_custom_call.1} parent=1 // pred_region
      _
    $region13: #{tpu_custom_call.1} parent=1 // pred_fallthru
      _
    // Predicated region
    $region14: #{tpu_custom_call.1} parent=1 // pred_check
      _
    $region15: #{tpu_custom_call.1} parent=1 // pred_check_branch
      %39 = sbr.rel (0) target = $region17
    $region16: #{tpu_custom_call.1} parent=1 // pred_region
      %s41 = ssub.s32 32, 32
      %42 = vsyncadd [#allocation7], %s41
      %s44 = sshll.u32 [#allocation6], 4
      %s45 = int_to_ptr.vmem [resolvable:$true] %s44
      %47 = dma.hbm_to_vmem [thread:$0]  %s3, 32, %s45, [#allocation7]
    $region17: #{tpu_custom_call.1} parent=1 // pred_fallthru
      _
    // Predicated region
    $region18: #{tpu_custom_call.1} parent=1 // pred_check
      _
    $region19: #{tpu_custom_call.1} parent=1 // pred_check_branch
      %49 = sbr.rel (0) target = $region21
    $region20: #{tpu_custom_call.1} parent=1 // pred_region
      %s51 = ssub.s32 2048, 2048
      %52 = vsyncadd [#allocation7], %s51
      %s53 = sshll.u32 [#allocation8], 4
      %s54 = int_to_ptr.vmem [resolvable:$true] %s53
      %59 = dma.hbm_to_vmem [thread:$0]  %s4, 2048, %s54, [#allocation7], 64, 64, 4
    $region21: #{tpu_custom_call.1} parent=1 // pred_fallthru
      _
    // Predicated region
    $region22: #{tpu_custom_call.1} parent=1 // pred_check
      _
    $region23: #{tpu_custom_call.1} parent=1 // pred_check_branch
      %61 = sbr.rel (0) target = $region25
    $region24: #{tpu_custom_call.1} parent=1 // pred_region
      _
    $region25: #{tpu_custom_call.1} parent=1 // pred_fallthru
      _
    // Predicated region
    $region26: #{tpu_custom_call.1} parent=1 // pred_check
      _
    $region27: #{tpu_custom_call.1} parent=1 // pred_check_branch
      %63 = sbr.rel (0) target = $region29
    $region28: #{tpu_custom_call.1} parent=1 // pred_region
      _
    $region29: #{tpu_custom_call.1} parent=1 // pred_fallthru
      _
    // Predicated region
    $region30: #{tpu_custom_call.1} parent=1 // pred_check
      _
    $region31: #{tpu_custom_call.1} parent=1 // pred_check_branch
      %65 = sbr.rel (0) target = $region33
    $region32: #{tpu_custom_call.1} parent=1 // pred_region
      _
    $region33: #{tpu_custom_call.1} parent=1 // pred_fallthru
      _
    // Predicated region
    $region34: #{tpu_custom_call.1} parent=1 // pred_check
      _
    $region35: #{tpu_custom_call.1} parent=1 // pred_check_branch
      %67 = sbr.rel (0) target = $region37
    $region36: #{tpu_custom_call.1} parent=1 // pred_region
      %s69 = ssub.s32 2048, 2048
      %70 = vsyncadd [#allocation10], %s69
      %s71 = sshll.u32 [#allocation9], 4
      %s72 = int_to_ptr.vmem [resolvable:$true] %s71
      %77 = dma.hbm_to_vmem [thread:$0]  %s8, 2048, %s72, [#allocation10], 64, 64, 4
    $region37: #{tpu_custom_call.1} parent=1 // pred_fallthru
      _
    // Predicated region
    $region38: #{tpu_custom_call.1} parent=1 // pred_check
      _
    $region39: #{tpu_custom_call.1} parent=1 // pred_check_branch
      %79 = sbr.rel (0) target = $region41
    $region40: #{tpu_custom_call.1} parent=1 // pred_region
      _
    $region41: #{tpu_custom_call.1} parent=1 // pred_fallthru
      _
    // Predicated region
    $region42: #{tpu_custom_call.1} parent=1 // pred_check
      _
    $region43: #{tpu_custom_call.1} parent=1 // pred_check_branch
      %81 = sbr.rel (0) target = $region45
    $region44: #{tpu_custom_call.1} parent=1 // pred_region
      _
    $region45: #{tpu_custom_call.1} parent=1 // pred_fallthru
      _
    // Predicated region
    $region46: #{tpu_custom_call.1} parent=1 // pred_check
      _
    $region47: #{tpu_custom_call.1} parent=1 // pred_check_branch
      %83 = sbr.rel (0) target = $region49
    $region48: #{tpu_custom_call.1} parent=1 // pred_region
      _
    $region49: #{tpu_custom_call.1} parent=1 // pred_fallthru
      _
    // Predicated region
    $region50: #{tpu_custom_call.1} parent=1 // pred_check
      _
    $region51: #{tpu_custom_call.1} parent=1 // pred_check_branch
      %85 = sbr.rel (0) target = $region53
    $region52: #{tpu_custom_call.1} parent=1 // pred_region
      %86 = dma.done [#allocation5], 128
    $region53: #{tpu_custom_call.1} parent=1 // pred_fallthru
      _
    // Predicated region
    $region54: #{tpu_custom_call.1} parent=1 // pred_check
      _
    $region55: #{tpu_custom_call.1} parent=1 // pred_check_branch
      %88 = sbr.rel (0) target = $region57
    $region56: #{tpu_custom_call.1} parent=1 // pred_region
      %89 = dma.done [#allocation7], 32
    $region57: #{tpu_custom_call.1} parent=1 // pred_fallthru
      _
    // Predicated region
    $region58: #{tpu_custom_call.1} parent=1 // pred_check
      _
    $region59: #{tpu_custom_call.1} parent=1 // pred_check_branch
      %91 = sbr.rel (0) target = $region61
    $region60: #{tpu_custom_call.1} parent=1 // pred_region
      %92 = dma.done [#allocation7], 2048
    $region61: #{tpu_custom_call.1} parent=1 // pred_fallthru
      _
    // Predicated region
    $region62: #{tpu_custom_call.1} parent=1 // pred_check
      _
    $region63: #{tpu_custom_call.1} parent=1 // pred_check_branch
      %94 = sbr.rel (0) target = $region65
    $region64: #{tpu_custom_call.1} parent=1 // pred_region
      %95 = dma.done [#allocation10], 2048
    $region65: #{tpu_custom_call.1} parent=1 // pred_fallthru
      _
    %v97 = vld [vmem:[#allocation4] sm:$0xf]
    %v98 = vld [vmem:[#allocation4 + $0x4] sm:$0xf]
    %v99 = vld [vmem:[%s1] sm:$0xf]
    %v100 = vld [vmem:[%s1 + $0x4] sm:$0xf]
    %v101 = vld [vmem:[%s2] sm:$0xff]
    %v102 = vld [vmem:[%s2 + $0x8] sm:$0xff]
    %v103 = vld [vmem:[#allocation6] sm:$0x3]
    %v105 = vlaneseq
    %v106 = vshrl.u32 %v105, 7
    %v107 = vsub.s32 0, %v106
    %v108 = vrot.slane %v103, %v107
    %v109 = vlaneseq
    %v110 = vshrl.u32 %v109, 7
    %v111 = vsub.s32 1, %v110
    %v112 = vrot.slane %v103, %v111
    %v117 = vunpack.c.l.b16 %v97
    %v118 = vunpack.c.l.b16 %v98
    %v119 = vpack.c.b16 %v118, %v117
    %v122 = vunpack.c.l.b16 %v101
    %v123 = vunpack.c.h.b16 %v101
    %v124 = vunpack.c.l.b16 %v102
    %v125 = vunpack.c.h.b16 %v102
    %v126 = vpack.c.b16 %v124, %v122
    %v127 = vpack.c.b16 %v125, %v123
    %vm130 = vcmask 130048
    %v132 = vsel %vm130, %v119, 0
    %134 = vmatprep.subr.bf16.mxu0 0
    %135 = vmatpush1.bf16.msra.mxu0 0
    %136 = vmatprep.subr.bf16.mxu0 0
    %137 = vmatpush1.bf16.msra.mxu0 0
    %138 = vmatprep.subr.bf16.mxu0 0
    %139 = vmatpush1.bf16.msra.mxu0 0
    %140 = vmatprep.subr.bf16.mxu0 0
    %141 = vmatpush1.bf16.msra.mxu0 0
    %142 = vmatprep.subr.bf16.mxu0 0
    %143 = vmatpush1.bf16.msra.mxu0 0
    %144 = vmatprep.subr.bf16.mxu0 0
    %145 = vmatpush1.bf16.msra.mxu0 0
    %146 = vmatprep.subr.bf16.mxu0 0
    %147 = vmatpush1.bf16.msra.mxu0 0
    %148 = vmatprep.subr.bf16.mxu0 %v127
    %149 = vmatpush1.bf16.msra.mxu0 %v126
    %150 = vmatprep.subr.bf16.mxu0 0
    %151 = vmatpush2.bf16.msra.mxu0 0
    %152 = vmatprep.subr.bf16.mxu0 0
    %153 = vmatpush2.bf16.msra.mxu0 0
    %154 = vmatprep.subr.bf16.mxu0 0
    %155 = vmatpush2.bf16.msra.mxu0 0
    %156 = vmatprep.subr.bf16.mxu0 0
    %157 = vmatpush2.bf16.msra.mxu0 0
    %158 = vmatprep.subr.bf16.mxu0 0
    %159 = vmatpush2.bf16.msra.mxu0 0
    %160 = vmatprep.subr.bf16.mxu0 0
    %161 = vmatpush2.bf16.msra.mxu0 0
    %162 = vmatprep.subr.bf16.mxu0 0
    %163 = vmatpush2.bf16.msra.mxu0 0
    %164 = vmatprep.subr.bf16.mxu0 0
    %165 = vmatpush2.bf16.msra.mxu0 0
    %166 = vmatprep.mubr.bf16.mxu0 0
    %167 = vmatmul.mubr.bf16.gmra.mxu0 %v132
    %v168 = vpop.f32.mrf.mxu0
    %v169 = vadd.f32 %v108, %v168
    %v170 = vpop.f32.mrf.mxu0
    %v171 = vadd.f32 %v112, %v170
    %v172 = vpop.f32.mrf.mxu0
    %v173 = vadd.f32 %v108, %v172
    %v174 = vpop.f32.mrf.mxu0
    %v175 = vadd.f32 %v112, %v174
    %176 = vdwg.mxu0
    %v177 = vmax.f32 %v169, 0.0
    %v178 = vmax.f32 %v171, 0.0
    %v179 = vmax.f32 %v173, 0.0
    %v180 = vmax.f32 %v175, 0.0
    %v181 = vpack.c.bf16 %v179, %v177
    %v182 = vpack.c.bf16 %v180, %v178
    %v183 = vld [vmem:[#allocation8] sm:$0xf]
    %v184 = vld [vmem:[#allocation8 + $0x4] sm:$0xf]
    %v185 = vld [vmem:[#allocation8 + $0x8] sm:$0xf]
    %v186 = vld [vmem:[#allocation8 + $0xc] sm:$0xf]
    %v187 = vld [vmem:[#allocation8 + $0x10] sm:$0xf]
    %v188 = vld [vmem:[#allocation8 + $0x14] sm:$0xf]
    %v189 = vld [vmem:[#allocation8 + $0x18] sm:$0xf]
    %v190 = vld [vmem:[#allocation8 + $0x1c] sm:$0xf]
    %v191 = vld [vmem:[#allocation8 + $0x20] sm:$0xf]
    %v192 = vld [vmem:[#allocation8 + $0x24] sm:$0xf]
    %v193 = vld [vmem:[#allocation8 + $0x28] sm:$0xf]
    %v194 = vld [vmem:[#allocation8 + $0x2c] sm:$0xf]
    %v195 = vld [vmem:[#allocation8 + $0x30] sm:$0xf]
    %v196 = vld [vmem:[#allocation8 + $0x34] sm:$0xf]
    %v197 = vld [vmem:[#allocation8 + $0x38] sm:$0xf]
    %v198 = vld [vmem:[#allocation8 + $0x3c] sm:$0xf]
    %v199 = vld [vmem:[#allocation8 + $0x40] sm:$0xf]
    %v200 = vld [vmem:[#allocation8 + $0x44] sm:$0xf]
    %v201 = vld [vmem:[#allocation8 + $0x48] sm:$0xf]
    %v202 = vld [vmem:[#allocation8 + $0x4c] sm:$0xf]
    %v203 = vld [vmem:[#allocation8 + $0x50] sm:$0xf]
    %v204 = vld [vmem:[#allocation8 + $0x54] sm:$0xf]
    %v205 = vld [vmem:[#allocation8 + $0x58] sm:$0xf]
    %v206 = vld [vmem:[#allocation8 + $0x5c] sm:$0xf]
    %v207 = vld [vmem:[#allocation8 + $0x60] sm:$0xf]
    %v208 = vld [vmem:[#allocation8 + $0x64] sm:$0xf]
    %v209 = vld [vmem:[#allocation8 + $0x68] sm:$0xf]
    %v210 = vld [vmem:[#allocation8 + $0x6c] sm:$0xf]
    %v211 = vld [vmem:[#allocation8 + $0x70] sm:$0xf]
    %v212 = vld [vmem:[#allocation8 + $0x74] sm:$0xf]
    %v213 = vld [vmem:[#allocation8 + $0x78] sm:$0xf]
    %v214 = vld [vmem:[#allocation8 + $0x7c] sm:$0xf]
    %v215 = vld [vmem:[%s5] sm:$0x1]
    %v217 = vlaneseq
    %v218 = vshrl.u32 %v217, 7
    %v219 = vsub.s32 0, %v218
    %v220 = vrot.slane %v215, %v219
    %v254 = vunpack.c.l.b16 %v183
    %v255 = vunpack.c.l.b16 %v184
    %v256 = vunpack.c.l.b16 %v185
    %v257 = vunpack.c.l.b16 %v186
    %v258 = vunpack.c.l.b16 %v187
    %v259 = vunpack.c.l.b16 %v188
    %v260 = vunpack.c.l.b16 %v189
    %v261 = vunpack.c.l.b16 %v190
    %v262 = vunpack.c.l.b16 %v191
    %v263 = vunpack.c.l.b16 %v192
    %v264 = vunpack.c.l.b16 %v193
    %v265 = vunpack.c.l.b16 %v194
    %v266 = vunpack.c.l.b16 %v195
    %v267 = vunpack.c.l.b16 %v196
    %v268 = vunpack.c.l.b16 %v197
    %v269 = vunpack.c.l.b16 %v198
    %v270 = vunpack.c.l.b16 %v199
    %v271 = vunpack.c.l.b16 %v200
    %v272 = vunpack.c.l.b16 %v201
    %v273 = vunpack.c.l.b16 %v202
    %v274 = vunpack.c.l.b16 %v203
    %v275 = vunpack.c.l.b16 %v204
    %v276 = vunpack.c.l.b16 %v205
    %v277 = vunpack.c.l.b16 %v206
    %v278 = vunpack.c.l.b16 %v207
    %v279 = vunpack.c.l.b16 %v208
    %v280 = vunpack.c.l.b16 %v209
    %v281 = vunpack.c.l.b16 %v210
    %v282 = vunpack.c.l.b16 %v211
    %v283 = vunpack.c.l.b16 %v212
    %v284 = vunpack.c.l.b16 %v213
    %v285 = vunpack.c.l.b16 %v214
    %v286 = vpack.c.b16 %v255, %v254
    %v287 = vpack.c.b16 %v257, %v256
    %v288 = vpack.c.b16 %v259, %v258
    %v289 = vpack.c.b16 %v261, %v260
    %v290 = vpack.c.b16 %v263, %v262
    %v291 = vpack.c.b16 %v265, %v264
    %v292 = vpack.c.b16 %v267, %v266
    %v293 = vpack.c.b16 %v269, %v268
    %v294 = vpack.c.b16 %v271, %v270
    %v295 = vpack.c.b16 %v273, %v272
    %v296 = vpack.c.b16 %v275, %v274
    %v297 = vpack.c.b16 %v277, %v276
    %v298 = vpack.c.b16 %v279, %v278
    %v299 = vpack.c.b16 %v281, %v280
    %v300 = vpack.c.b16 %v283, %v282
    %v301 = vpack.c.b16 %v285, %v284
    %318 = vmatprep.subr.bf16.mxu0 0
    %319 = vmatpush1.bf16.msra.mxu0 %v293
    %320 = vmatprep.subr.bf16.mxu0 0
    %321 = vmatpush1.bf16.msra.mxu0 %v292
    %322 = vmatprep.subr.bf16.mxu0 0
    %323 = vmatpush1.bf16.msra.mxu0 %v291
    %324 = vmatprep.subr.bf16.mxu0 0
    %325 = vmatpush1.bf16.msra.mxu0 %v290
    %326 = vmatprep.subr.bf16.mxu0 0
    %327 = vmatpush1.bf16.msra.mxu0 %v289
    %328 = vmatprep.subr.bf16.mxu0 0
    %329 = vmatpush1.bf16.msra.mxu0 %v288
    %330 = vmatprep.subr.bf16.mxu0 0
    %331 = vmatpush1.bf16.msra.mxu0 %v287
    %332 = vmatprep.subr.bf16.mxu0 0
    %333 = vmatpush1.bf16.msra.mxu0 %v286
    %334 = vmatprep.subr.bf16.mxu0 0
    %335 = vmatpush2.bf16.msra.mxu0 %v301
    %336 = vmatprep.subr.bf16.mxu0 0
    %337 = vmatpush2.bf16.msra.mxu0 %v300
    %338 = vmatprep.subr.bf16.mxu0 0
    %339 = vmatpush2.bf16.msra.mxu0 %v299
    %340 = vmatprep.subr.bf16.mxu0 0
    %341 = vmatpush2.bf16.msra.mxu0 %v298
    %342 = vmatprep.subr.bf16.mxu0 0
    %343 = vmatpush2.bf16.msra.mxu0 %v297
    %344 = vmatprep.subr.bf16.mxu0 0
    %345 = vmatpush2.bf16.msra.mxu0 %v296
    %346 = vmatprep.subr.bf16.mxu0 0
    %347 = vmatpush2.bf16.msra.mxu0 %v295
    %348 = vmatprep.subr.bf16.mxu0 0
    %349 = vmatpush2.bf16.msra.mxu0 %v294
    %350 = vmatprep.mubr.bf16.mxu0 %v182
    %351 = vmatmul.mubr.bf16.gmra.mxu0 %v181
    %v352 = vpop.f32.mrf.mxu0
    %v353 = vadd.f32 %v220, %v352
    %v354 = vpop.f32.mrf.mxu0
    %v355 = vpop.f32.mrf.mxu0
    %v356 = vadd.f32 %v220, %v355
    %v357 = vpop.f32.mrf.mxu0
    %358 = vdwg.mxu0
    %v359 = vmax.f32 %v353, 0.0
    %v360 = vmax.f32 %v356, 0.0
    %v361 = vld [vmem:[%s6] sm:$0xf]
    %v362 = vld [vmem:[%s7] sm:$0x1]
    %v364 = vlaneseq
    %v365 = vshrl.u32 %v364, 7
    %v366 = vsub.s32 0, %v365
    %v367 = vrot.slane %v362, %v366
    %v371 = vunpack.c.l.b16 %v99
    %v372 = vunpack.c.l.b16 %v100
    %v373 = vpack.c.b16 %v372, %v371
    %vm374 = vcmask 64512
    %v376 = vsel %vm374, %v373, 0
    %vm378 = vcmask 1043456
    %v380 = vsel %vm378, %v361, 0
    %382 = vmatprep.subr.bf16.mxu0 0
    %383 = vmatpush1.bf16.msra.mxu0 0
    %384 = vmatprep.subr.bf16.mxu0 0
    %385 = vmatpush1.bf16.msra.mxu0 0
    %386 = vmatprep.subr.bf16.mxu0 0
    %387 = vmatpush1.bf16.msra.mxu0 0
    %388 = vmatprep.subr.bf16.mxu0 0
    %389 = vmatpush1.bf16.msra.mxu0 0
    %390 = vmatprep.subr.bf16.mxu0 0
    %391 = vmatpush1.bf16.msra.mxu0 0
    %392 = vmatprep.subr.bf16.mxu0 0
    %393 = vmatpush1.bf16.msra.mxu0 0
    %394 = vmatprep.subr.bf16.mxu0 0
    %395 = vmatpush1.bf16.msra.mxu0 0
    %396 = vmatprep.subr.bf16.mxu0 0
    %397 = vmatpush1.bf16.msra.mxu0 %v380
    %398 = vmatprep.subr.bf16.mxu0 0
    %399 = vmatpush2.bf16.msra.mxu0 0
    %400 = vmatprep.subr.bf16.mxu0 0
    %401 = vmatpush2.bf16.msra.mxu0 0
    %402 = vmatprep.subr.bf16.mxu0 0
    %403 = vmatpush2.bf16.msra.mxu0 0
    %404 = vmatprep.subr.bf16.mxu0 0
    %405 = vmatpush2.bf16.msra.mxu0 0
    %406 = vmatprep.subr.bf16.mxu0 0
    %407 = vmatpush2.bf16.msra.mxu0 0
    %408 = vmatprep.subr.bf16.mxu0 0
    %409 = vmatpush2.bf16.msra.mxu0 0
    %410 = vmatprep.subr.bf16.mxu0 0
    %411 = vmatpush2.bf16.msra.mxu0 0
    %412 = vmatprep.subr.bf16.mxu0 0
    %413 = vmatpush2.bf16.msra.mxu0 0
    %414 = vmatprep.mubr.bf16.mxu0 0
    %415 = vmatmul.mubr.bf16.gmra.mxu0 %v376
    %v416 = vpop.f32.mrf.mxu0
    %v417 = vadd.f32 %v367, %v416
    %v418 = vpop.f32.mrf.mxu0
    %v419 = vpop.f32.mrf.mxu0
    %v420 = vadd.f32 %v367, %v419
    %v421 = vpop.f32.mrf.mxu0
    %422 = vdwg.mxu0
    %v423 = vmax.f32 %v417, 0.0
    %v424 = vmax.f32 %v420, 0.0
    %v425 = vpack.c.bf16 %v360, %v359
    %v427 = vunpack.c.l.b16 %v425
    %v428 = vunpack.c.h.b16 %v425
    %v429 = vpack.c.b16 %v427, %v427
    %v430 = vpack.c.b16 %v428, %v428
    %433 = vst [vmem:[#allocation2] sm:$0xf] %v429
    %434 = vst [vmem:[#allocation2 + $0x8] sm:$0xf] %v430
    %v435 = vpack.c.bf16 %v424, %v423
    %v437 = vunpack.c.l.b16 %v435
    %v438 = vunpack.c.h.b16 %v435
    %v439 = vpack.c.b16 %v437, %v437
    %v440 = vpack.c.b16 %v438, %v438
    %443 = vst [vmem:[#allocation2 + $0x4] sm:$0xf] %v439
    %444 = vst [vmem:[#allocation2 + $0xc] sm:$0xf] %v440
    %v445 = vld [vmem:[#allocation2] sm:$0xff]
    %v446 = vld [vmem:[#allocation2 + $0x8] sm:$0xff]
    %v447 = vld [vmem:[#allocation9] sm:$0xf]
    %v448 = vld [vmem:[#allocation9 + $0x4] sm:$0xf]
    %v449 = vld [vmem:[#allocation9 + $0x8] sm:$0xf]
    %v450 = vld [vmem:[#allocation9 + $0xc] sm:$0xf]
    %v451 = vld [vmem:[#allocation9 + $0x10] sm:$0xf]
    %v452 = vld [vmem:[#allocation9 + $0x14] sm:$0xf]
    %v453 = vld [vmem:[#allocation9 + $0x18] sm:$0xf]
    %v454 = vld [vmem:[#allocation9 + $0x1c] sm:$0xf]
    %v455 = vld [vmem:[#allocation9 + $0x20] sm:$0xf]
    %v456 = vld [vmem:[#allocation9 + $0x24] sm:$0xf]
    %v457 = vld [vmem:[#allocation9 + $0x28] sm:$0xf]
    %v458 = vld [vmem:[#allocation9 + $0x2c] sm:$0xf]
    %v459 = vld [vmem:[#allocation9 + $0x30] sm:$0xf]
    %v460 = vld [vmem:[#allocation9 + $0x34] sm:$0xf]
    %v461 = vld [vmem:[#allocation9 + $0x38] sm:$0xf]
    %v462 = vld [vmem:[#allocation9 + $0x3c] sm:$0xf]
    %v463 = vld [vmem:[#allocation9 + $0x40] sm:$0xf]
    %v464 = vld [vmem:[#allocation9 + $0x44] sm:$0xf]
    %v465 = vld [vmem:[#allocation9 + $0x48] sm:$0xf]
    %v466 = vld [vmem:[#allocation9 + $0x4c] sm:$0xf]
    %v467 = vld [vmem:[#allocation9 + $0x50] sm:$0xf]
    %v468 = vld [vmem:[#allocation9 + $0x54] sm:$0xf]
    %v469 = vld [vmem:[#allocation9 + $0x58] sm:$0xf]
    %v470 = vld [vmem:[#allocation9 + $0x5c] sm:$0xf]
    %v471 = vld [vmem:[#allocation9 + $0x60] sm:$0xf]
    %v472 = vld [vmem:[#allocation9 + $0x64] sm:$0xf]
    %v473 = vld [vmem:[#allocation9 + $0x68] sm:$0xf]
    %v474 = vld [vmem:[#allocation9 + $0x6c] sm:$0xf]
    %v475 = vld [vmem:[#allocation9 + $0x70] sm:$0xf]
    %v476 = vld [vmem:[#allocation9 + $0x74] sm:$0xf]
    %v477 = vld [vmem:[#allocation9 + $0x78] sm:$0xf]
    %v478 = vld [vmem:[#allocation9 + $0x7c] sm:$0xf]
    %v479 = vld [vmem:[%s9] sm:$0x1]
    %v481 = vlaneseq
    %v482 = vshrl.u32 %v481, 7
    %v483 = vsub.s32 0, %v482
    %v484 = vrot.slane %v479, %v483
    %v488 = vunpack.c.l.b16 %v445
    %v489 = vunpack.c.h.b16 %v445
    %v490 = vunpack.c.l.b16 %v446
    %v491 = vunpack.c.h.b16 %v446
    %v492 = vpack.c.b16 %v490, %v488
    %v493 = vpack.c.b16 %v491, %v489
    %v528 = vunpack.c.l.b16 %v447
    %v529 = vunpack.c.l.b16 %v448
    %v530 = vunpack.c.l.b16 %v449
    %v531 = vunpack.c.l.b16 %v450
    %v532 = vunpack.c.l.b16 %v451
    %v533 = vunpack.c.l.b16 %v452
    %v534 = vunpack.c.l.b16 %v453
    %v535 = vunpack.c.l.b16 %v454
    %v536 = vunpack.c.l.b16 %v455
    %v537 = vunpack.c.l.b16 %v456
    %v538 = vunpack.c.l.b16 %v457
    %v539 = vunpack.c.l.b16 %v458
    %v540 = vunpack.c.l.b16 %v459
    %v541 = vunpack.c.l.b16 %v460
    %v542 = vunpack.c.l.b16 %v461
    %v543 = vunpack.c.l.b16 %v462
    %v544 = vunpack.c.l.b16 %v463
    %v545 = vunpack.c.l.b16 %v464
    %v546 = vunpack.c.l.b16 %v465
    %v547 = vunpack.c.l.b16 %v466
    %v548 = vunpack.c.l.b16 %v467
    %v549 = vunpack.c.l.b16 %v468
    %v550 = vunpack.c.l.b16 %v469
    %v551 = vunpack.c.l.b16 %v470
    %v552 = vunpack.c.l.b16 %v471
    %v553 = vunpack.c.l.b16 %v472
    %v554 = vunpack.c.l.b16 %v473
    %v555 = vunpack.c.l.b16 %v474
    %v556 = vunpack.c.l.b16 %v475
    %v557 = vunpack.c.l.b16 %v476
    %v558 = vunpack.c.l.b16 %v477
    %v559 = vunpack.c.l.b16 %v478
    %v560 = vpack.c.b16 %v529, %v528
    %v561 = vpack.c.b16 %v531, %v530
    %v562 = vpack.c.b16 %v533, %v532
    %v563 = vpack.c.b16 %v535, %v534
    %v564 = vpack.c.b16 %v537, %v536
    %v565 = vpack.c.b16 %v539, %v538
    %v566 = vpack.c.b16 %v541, %v540
    %v567 = vpack.c.b16 %v543, %v542
    %v568 = vpack.c.b16 %v545, %v544
    %v569 = vpack.c.b16 %v547, %v546
    %v570 = vpack.c.b16 %v549, %v548
    %v571 = vpack.c.b16 %v551, %v550
    %v572 = vpack.c.b16 %v553, %v552
    %v573 = vpack.c.b16 %v555, %v554
    %v574 = vpack.c.b16 %v557, %v556
    %v575 = vpack.c.b16 %v559, %v558
    %592 = vmatprep.subr.bf16.mxu0 0
    %593 = vmatpush1.bf16.msra.mxu0 %v567
    %594 = vmatprep.subr.bf16.mxu0 0
    %595 = vmatpush1.bf16.msra.mxu0 %v566
    %596 = vmatprep.subr.bf16.mxu0 0
    %597 = vmatpush1.bf16.msra.mxu0 %v565
    %598 = vmatprep.subr.bf16.mxu0 0
    %599 = vmatpush1.bf16.msra.mxu0 %v564
    %600 = vmatprep.subr.bf16.mxu0 0
    %601 = vmatpush1.bf16.msra.mxu0 %v563
    %602 = vmatprep.subr.bf16.mxu0 0
    %603 = vmatpush1.bf16.msra.mxu0 %v562
    %604 = vmatprep.subr.bf16.mxu0 0
    %605 = vmatpush1.bf16.msra.mxu0 %v561
    %606 = vmatprep.subr.bf16.mxu0 0
    %607 = vmatpush1.bf16.msra.mxu0 %v560
    %608 = vmatprep.subr.bf16.mxu0 0
    %609 = vmatpush2.bf16.msra.mxu0 %v575
    %610 = vmatprep.subr.bf16.mxu0 0
    %611 = vmatpush2.bf16.msra.mxu0 %v574
    %612 = vmatprep.subr.bf16.mxu0 0
    %613 = vmatpush2.bf16.msra.mxu0 %v573
    %614 = vmatprep.subr.bf16.mxu0 0
    %615 = vmatpush2.bf16.msra.mxu0 %v572
    %616 = vmatprep.subr.bf16.mxu0 0
    %617 = vmatpush2.bf16.msra.mxu0 %v571
    %618 = vmatprep.subr.bf16.mxu0 0
    %619 = vmatpush2.bf16.msra.mxu0 %v570
    %620 = vmatprep.subr.bf16.mxu0 0
    %621 = vmatpush2.bf16.msra.mxu0 %v569
    %622 = vmatprep.subr.bf16.mxu0 0
    %623 = vmatpush2.bf16.msra.mxu0 %v568
    %624 = vmatprep.mubr.bf16.mxu0 %v493
    %625 = vmatmul.mubr.bf16.gmra.mxu0 %v492
    %v626 = vpop.f32.mrf.mxu0
    %v627 = vadd.f32 %v484, %v626
    %v628 = vpop.f32.mrf.mxu0
    %v629 = vpop.f32.mrf.mxu0
    %v630 = vadd.f32 %v484, %v629
    %v631 = vpop.f32.mrf.mxu0
    %632 = vdwg.mxu0
    %v633 = vmax.f32 %v627, 0.0
    %v634 = vmax.f32 %v630, 0.0
    %v635 = vld [vmem:[%s10] sm:$0x1]
    %v637 = vlaneseq
    %v638 = vshrl.u32 %v637, 7
    %v639 = vsub.s32 0, %v638
    %v640 = vrot.slane %v635, %v639
    %v642 = vmul.f32 %v633, %v640
    %v643 = vmul.f32 %v634, %v640
    %644 = vadd.xlane.f32.xlu0 %v642
    %v645 = vpop.xlane.xlu0 %644
    %646 = vadd.xlane.f32.xlu0 %v643
    %v647 = vpop.xlane.xlu0 %646
    %v648 = vld [vmem:[#allocation3] sm:$0x1]
    %v650 = vlaneseq
    %v651 = vshrl.u32 %v650, 7
    %v652 = vsub.s32 0, %v651
    %v653 = vrot.slane %v648, %v652
    %v655 = vadd.f32 %v645, %v653
    %v656 = vadd.f32 %v647, %v653
    %vm657 = vcmask 7168
    %658 = vst.msk [vmem:[%s12] sm:$0xff] %vm657, %v655
    %659 = vst.msk [vmem:[%s12 + $0x8] sm:$0xff] %vm657, %v656
    // Predicated region
    $region66: #{tpu_custom_call.1} parent=1 // pred_check
      _
    $region67: #{tpu_custom_call.1} parent=1 // pred_check_branch
      %661 = sbr.rel (0) target = $region69
    $region68: #{tpu_custom_call.1} parent=1 // pred_region
      _
    $region69: #{tpu_custom_call.1} parent=1 // pred_fallthru
      _
    // Predicated region
    $region70: #{tpu_custom_call.1} parent=1 // pred_check
      _
    $region71: #{tpu_custom_call.1} parent=1 // pred_check_branch
      %663 = sbr.rel (0) target = $region73
    $region72: #{tpu_custom_call.1} parent=1 // pred_region
      _
    $region73: #{tpu_custom_call.1} parent=1 // pred_fallthru
      _
    %664 = vsyncpa [#allocation5], 1
    %665 = vsyncpa [#allocation7], 1
    %666 = vsyncpa [#allocation10], 1

</llo_original>
